<compile_context>
chip_gen: v7x
topology: tpu7x:2x2x1
jax: 0.10.0
libtpu: 0.0.40
codegen_flags: <defaults>
</compile_context>

<pallas_src>
import functools

import jax
import jax.numpy as jnp
from jax.experimental import pallas as pl
from jax.experimental.pallas import tpu as pltpu


def _round_up(x: int, m: int) -> int:
    return (x + m - 1) // m * m


def _linear_logsoftmax_kernel(x_ref, w_ref, b_ref, logits_ref, logp_ref):
    # x_ref: (TM, D) f32    w_ref: (D, C_PAD) f32    b_ref: (1, C_PAD) f32
    # Padded weight columns are zero and padded bias lanes are -1e30, so the
    # padded logits are already "masked" for the softmax reductions.
    logits = (
        jnp.dot(x_ref[...], w_ref[...], preferred_element_type=jnp.float32)
        + b_ref[...]
    )
    logits_ref[...] = logits

    # numerically-stable log-softmax over the class axis
    m = jnp.max(logits, axis=1, keepdims=True)
    shifted = logits - m
    lse = jnp.log(jnp.sum(jnp.exp(shifted), axis=1, keepdims=True))
    logp_ref[...] = shifted - lse


def prepare_params(w, b):
    """One-time padding of the Linear parameters (hoisted out of the forward).

    w: (D, num_classes), b: (num_classes,). Returns (w_p, b_p, num_classes)
    with classes padded to a lane-dense multiple of 128; padded bias lanes are
    -1e30 so padded logits fall out of the softmax reductions automatically.
    """
    d, num_classes = w.shape
    c_pad = _round_up(max(num_classes, 128), 128)
    w_p = (jnp.zeros((d, c_pad), jnp.float32)
           .at[:, :num_classes].set(w.astype(jnp.float32)))
    b_p = (jnp.full((1, c_pad), -1e30, jnp.float32)
           .at[0, :num_classes].set(b.astype(jnp.float32)))
    return w_p, b_p, num_classes


def model_forward(x, w_p, b_p, num_classes, *, tm_cap: int = 512):
    """x: (B, C, H, W) float; w_p/b_p from prepare_params."""
    x = jnp.asarray(x, jnp.float32)
    batch = x.shape[0]
    x_flat = x.reshape(batch, -1)                 # == torch x.view(batch, -1)
    d = x_flat.shape[1]
    assert w_p.shape[0] == d
    c_pad = w_p.shape[1]

    # Sublane-align the batch only (no padding up to the tile size).
    b_pad = _round_up(max(batch, 8), 8)
    if b_pad != batch:
        x_flat = jnp.zeros((b_pad, d), jnp.float32).at[:batch].set(x_flat)

    # Batch tile: big (better pipelining), but keep >= 2 grid steps when there
    # is more than one sublane-group of rows so v7x's two TCs both get work.
    if b_pad <= 8:
        tm = b_pad
    else:
        tm = min(tm_cap, _round_up(pl.cdiv(b_pad, 2), 8))
    grid = (pl.cdiv(b_pad, tm),)

    cost = pl.CostEstimate(
        flops=2 * b_pad * d * c_pad,
        transcendentals=b_pad * c_pad,                       # exp in softmax
        bytes_accessed=(b_pad * d * 4                        # x (f32)
                        + d * c_pad * 4                      # w (f32)
                        + c_pad * 4                          # bias (f32)
                        + 2 * b_pad * c_pad * 4),            # two f32 outputs
    )

    logits_p, logp_p = pl.pallas_call(
        _linear_logsoftmax_kernel,
        out_shape=(
            jax.ShapeDtypeStruct((b_pad, c_pad), jnp.float32),   # logits
            jax.ShapeDtypeStruct((b_pad, c_pad), jnp.float32),   # log_softmax
        ),
        grid=grid,
        in_specs=[
            pl.BlockSpec((tm, d), lambda i: (i, 0)),        # batch-tiled x
            pl.BlockSpec((d, c_pad), lambda i: (0, 0)),     # resident weight
            pl.BlockSpec((1, c_pad), lambda i: (0, 0)),     # resident bias
        ],
        out_specs=(
            pl.BlockSpec((tm, c_pad), lambda i: (i, 0)),
            pl.BlockSpec((tm, c_pad), lambda i: (i, 0)),
        ),
        compiler_params=pltpu.CompilerParams(
            dimension_semantics=("parallel",)),
        cost_estimate=cost,
    )(x_flat, w_p, b_p)

    # Strip batch/class padding.
    return logits_p[:batch, :num_classes], logp_p[:batch, :num_classes]


if __name__ == "__main__":
    key = jax.random.PRNGKey(0)
    kx, kw, kb = jax.random.split(key, 3)

    B, C, H, W = 2, 4, 16, 16
    D = C * H * W                    # 1024 flattened features
    NUM_CLASSES = 16

    x = jax.random.normal(kx, (B, C, H, W), dtype=jnp.float32)
    # deterministic "Linear" params (kaiming-ish scale)
    w = jax.random.normal(kw, (D, NUM_CLASSES), dtype=jnp.float32) * (1.0 / D**0.5)
    b = jax.random.normal(kb, (NUM_CLASSES,), dtype=jnp.float32) * 0.01

    w_p, b_p, n_cls = prepare_params(w, b)       # one-time, out of forward path

    logits, logp = model_forward(x, w_p, b_p, n_cls)
    jax.block_until_ready((logits, logp))

    # Pure-JAX reference (f32 Linear + log_softmax, matching torch semantics).
    x_flat = x.reshape(B, -1)
    ref_logits = jnp.dot(x_flat, w, preferred_element_type=jnp.float32) + b
    ref_logp = jax.nn.log_softmax(ref_logits, axis=1)

    assert logits.shape == (B, NUM_CLASSES) and logp.shape == (B, NUM_CLASSES)
    assert jnp.allclose(logits, ref_logits, atol=3e-2, rtol=3e-2)
    assert jnp.allclose(logp, ref_logp, atol=3e-2, rtol=3e-2)
    # probabilities from log-softmax must sum to 1 per row
    assert jnp.allclose(jnp.sum(jnp.exp(logp), axis=1), 1.0, atol=1e-3)

    print("KERNEL_OK")
</pallas_src>

<mosaic_0001>
module attributes {stable_mosaic.version = 11 : i64} {
  func.func @_linear_logsoftmax_kernel(%arg0: i32, %arg1: memref<8x1024xf32, #tpu.memory_space<vmem>>, %arg2: memref<1024x128xf32, #tpu.memory_space<vmem>>, %arg3: memref<1x128xf32, #tpu.memory_space<vmem>>, %arg4: memref<8x128xf32, #tpu.memory_space<vmem>>, %arg5: memref<8x128xf32, #tpu.memory_space<vmem>>) attributes {dimension_semantics = [#tpu.dimension_semantics<parallel>], iteration_bounds = array<i64: 1>, scalar_prefetch = 0 : i64, scratch_operands = 0 : i64, tpu.core_type = #tpu.core_type<tc>, window_params = [{transform_indices = @transform_0, window_bounds = array<i64: 8, 1024>}, {pipeline_mode = #tpu.pipeline_mode<synchronous>, transform_indices = @transform_1, window_bounds = array<i64: 1024, 128>}, {pipeline_mode = #tpu.pipeline_mode<synchronous>, transform_indices = @transform_2, window_bounds = array<i64: 1, 128>}, {transform_indices = @transform_3, window_bounds = array<i64: 8, 128>}, {transform_indices = @transform_4, window_bounds = array<i64: 8, 128>}]} {
    %c0 = arith.constant 0 : index
    %c0_0 = arith.constant 0 : index
    %0 = vector.load %arg1[%c0, %c0_0] : memref<8x1024xf32, #tpu.memory_space<vmem>>, vector<8x1024xf32>
    %c0_1 = arith.constant 0 : index
    %c0_2 = arith.constant 0 : index
    %1 = vector.load %arg2[%c0_1, %c0_2] : memref<1024x128xf32, #tpu.memory_space<vmem>>, vector<1024x128xf32>
    %cst = arith.constant dense<0.000000e+00> : vector<8x128xf32>
    %2 = tpu.matmul %0, %1, %cst {dimension_numbers = #tpu.dot_dimension_numbers<[1], [0], [0], [1], [0, 0, 1, 1], [], []>} : vector<8x1024xf32>, vector<1024x128xf32>, vector<8x128xf32> -> vector<8x128xf32>
    %c0_3 = arith.constant 0 : index
    %c0_4 = arith.constant 0 : index
    %3 = vector.load %arg3[%c0_3, %c0_4] : memref<1x128xf32, #tpu.memory_space<vmem>>, vector<1x128xf32>
    %4 = vector.broadcast %3 : vector<1x128xf32> to vector<8x128xf32>
    %5 = arith.addf %2, %4 : vector<8x128xf32>
    %c0_5 = arith.constant 0 : index
    %c0_6 = arith.constant 0 : index
    %6 = vector.load %arg4[%c0_5, %c0_6] : memref<8x128xf32, #tpu.memory_space<vmem>>, vector<8x128xf32>
    tpu.vector_store %arg4[%c0_5, %c0_6], %5 {strides = array<i32>} : memref<8x128xf32, #tpu.memory_space<vmem>>, vector<8x128xf32>,
    %cst_7 = arith.constant dense<0xFF800000> : vector<8xf32>
    %7 = vector.multi_reduction <maximumf>, %5, %cst_7 [1] : vector<8x128xf32> to vector<8xf32>
    %8 = vector.shape_cast %7 : vector<8xf32> to vector<8x1xf32>
    %9 = vector.broadcast %8 : vector<8x1xf32> to vector<8x128xf32>
    %10 = arith.subf %5, %9 : vector<8x128xf32>
    %11 = math.exp %10 : vector<8x128xf32>
    %cst_8 = arith.constant dense<0.000000e+00> : vector<8xf32>
    %12 = vector.multi_reduction <add>, %11, %cst_8 [1] : vector<8x128xf32> to vector<8xf32>
    %13 = vector.shape_cast %12 : vector<8xf32> to vector<8x1xf32>
    %14 = math.log %13 : vector<8x1xf32>
    %15 = vector.broadcast %14 : vector<8x1xf32> to vector<8x128xf32>
    %16 = arith.subf %10, %15 : vector<8x128xf32>
    %c0_9 = arith.constant 0 : index
    %c0_10 = arith.constant 0 : index
    %17 = vector.load %arg5[%c0_9, %c0_10] : memref<8x128xf32, #tpu.memory_space<vmem>>, vector<8x128xf32>
    tpu.vector_store %arg5[%c0_9, %c0_10], %16 {strides = array<i32>} : memref<8x128xf32, #tpu.memory_space<vmem>>, vector<8x128xf32>,
    return
  }
  func.func @transform_0(%arg0: i32) -> (i32, i32) {
    %c0_i32 = arith.constant 0 : i32
    %c0_i32_0 = arith.constant 0 : i32
    return %arg0, %c0_i32 : i32, i32
  }
  func.func @transform_1(%arg0: i32) -> (i32, i32) {
    %c0_i32 = arith.constant 0 : i32
    %c0_i32_0 = arith.constant 0 : i32
    %c0_i32_1 = arith.constant 0 : i32
    return %c0_i32, %c0_i32_0 : i32, i32
  }
  func.func @transform_2(%arg0: i32) -> (i32, i32) {
    %c0_i32 = arith.constant 0 : i32
    %c0_i32_0 = arith.constant 0 : i32
    %c0_i32_1 = arith.constant 0 : i32
    return %c0_i32, %c0_i32_0 : i32, i32
  }
  func.func @transform_3(%arg0: i32) -> (i32, i32) {
    %c0_i32 = arith.constant 0 : i32
    %c0_i32_0 = arith.constant 0 : i32
    return %arg0, %c0_i32 : i32, i32
  }
  func.func @transform_4(%arg0: i32) -> (i32, i32) {
    %c0_i32 = arith.constant 0 : i32
    %c0_i32_0 = arith.constant 0 : i32
    return %arg0, %c0_i32 : i32, i32
  }
}

</mosaic_0001>

<llo_original>
// kernel: tpu_custom_call.1
$region0: #{tpu_custom_call.1}
  #allocation0 [shape = 'u32[]', space=smem, size = 0x4, offset = 0x4, fixed_abs, tag = 'smem constant byte address 0x4 - core index']
  #allocation1 [shape = 'u32[144,128]{1,0:T(1,128)}', space=vmem, size = 0x12000, scoped, tag = 'internal scratch']
  %s0 = inlined_call_operand.hbm [shape: f32[8,1024], index: 0, kind: input, shape index: {}]
  %s1 = inlined_call_operand.hbm [shape: f32[1024,128], index: 1, kind: input, shape index: {}]
  %s2 = inlined_call_operand.vmem [shape: f32[1,128], index: 2, kind: input, shape index: {}]
  %s3 = inlined_call_operand.hbm [shape: f32[8,128], index: 3, kind: output, shape index: {0}]
  %s4 = inlined_call_operand.hbm [shape: f32[8,128], index: 4, kind: output, shape index: {1}]
  %5 = xla_tuple %s3, %s4
  %s6 = sld [smem:[#allocation0]]
  $region38: #{tpu_custom_call.1} parent=0
    _
  %s8 = ssub.s32 1, %s6
  %s9 = scalar_select 0, %s8, %s6
  $region1: #{tpu_custom_call.1} parent=0
    #allocation2 [shape = 'u8[32768]{0}', space=vmem, size = 0x8000, scoped, tag = 'input window, operand 0, single buffered']
    #allocation3 [shape = 's32[1]{0}', space=sflag, size = 0x4, scoped, tag = 'scoped memory for tpu_custom_call.1']
    #allocation4 [shape = 's32[1]{0}', space=sflag, size = 0x4, scoped, tag = 'scoped memory for tpu_custom_call.1']
    #allocation5 [shape = 'u8[524288]{0}', space=vmem, size = 0x80000, scoped, tag = 'input window, operand 1, single buffered']
    #allocation6 [shape = 's32[1]{0}', space=sflag, size = 0x4, scoped, tag = 'scoped memory for tpu_custom_call.1']
    #allocation7 [shape = 'u8[4096]{0}', space=vmem, size = 0x1000, scoped, tag = 'output window, operand 0, single buffered']
    #allocation8 [shape = 'u8[4096]{0}', space=vmem, size = 0x1000, scoped, tag = 'output window, operand 1, single buffered']
    #allocation9 [shape = 's32[1]{0}', space=sflag, size = 0x4, scoped, tag = 'scoped memory for tpu_custom_call.1']
    %10 = vsyncpa [#allocation3], 0
    %11 = vsyncpa [#allocation6], 0
    %12 = vsyncpa [#allocation4], 0
    %13 = vsyncpa [#allocation9], 0
    // Predicated region
    $region2: #{tpu_custom_call.1} parent=1 // pred_check
      _
    $region3: #{tpu_custom_call.1} parent=1 // pred_check_branch
      %15 = sbr.rel (0) target = $region5
    $region4: #{tpu_custom_call.1} parent=1 // pred_region
      %s17 = ssub.s32 1024, 1024
      %18 = vsyncadd [#allocation3], %s17
      %s20 = sshll.u32 [#allocation2], 4
      %s21 = int_to_ptr.vmem [resolvable:$true] %s20
      %23 = dma.hbm_to_vmem [thread:$0]  %s0, 1024, %s21, [#allocation3]
    $region5: #{tpu_custom_call.1} parent=1 // pred_fallthru
      _
    // Predicated region
    $region6: #{tpu_custom_call.1} parent=1 // pred_check
      _
    $region7: #{tpu_custom_call.1} parent=1 // pred_check_branch
      %25 = sbr.rel (0) target = $region9
    $region8: #{tpu_custom_call.1} parent=1 // pred_region
      %s27 = ssub.s32 16384, 16384
      %28 = vsyncadd [#allocation6], %s27
      %s29 = sshll.u32 [#allocation5], 4
      %s30 = int_to_ptr.vmem [resolvable:$true] %s29
      %35 = dma.hbm_to_vmem [thread:$0]  %s1, 16384, %s30, [#allocation6], 128, 128, 8
    $region9: #{tpu_custom_call.1} parent=1 // pred_fallthru
      _
    // Predicated region
    $region10: #{tpu_custom_call.1} parent=1 // pred_check
      _
    $region11: #{tpu_custom_call.1} parent=1 // pred_check_branch
      %37 = sbr.rel (0) target = $region13
    $region12: #{tpu_custom_call.1} parent=1 // pred_region
      _
    $region13: #{tpu_custom_call.1} parent=1 // pred_fallthru
      _
    // Predicated region
    $region14: #{tpu_custom_call.1} parent=1 // pred_check
      _
    $region15: #{tpu_custom_call.1} parent=1 // pred_check_branch
      %39 = sbr.rel (0) target = $region17
    $region16: #{tpu_custom_call.1} parent=1 // pred_region
      %40 = dma.done [#allocation3], 1024
    $region17: #{tpu_custom_call.1} parent=1 // pred_fallthru
      _
    // Predicated region
    $region18: #{tpu_custom_call.1} parent=1 // pred_check
      _
    $region19: #{tpu_custom_call.1} parent=1 // pred_check_branch
      %42 = sbr.rel (0) target = $region21
    $region20: #{tpu_custom_call.1} parent=1 // pred_region
      %43 = dma.done [#allocation6], 16384
    $region21: #{tpu_custom_call.1} parent=1 // pred_fallthru
      _
    %v44 = vld [vmem:[#allocation2] sm:$0xff]
    %v45 = vld [vmem:[#allocation2 + $0x8] sm:$0xff]
    %v46 = vld [vmem:[#allocation2 + $0x10] sm:$0xff]
    %v47 = vld [vmem:[#allocation2 + $0x18] sm:$0xff]
    %v48 = vld [vmem:[#allocation2 + $0x20] sm:$0xff]
    %v49 = vld [vmem:[#allocation2 + $0x28] sm:$0xff]
    %v50 = vld [vmem:[#allocation2 + $0x30] sm:$0xff]
    %v51 = vld [vmem:[#allocation2 + $0x38] sm:$0xff]
    %v52 = vld [vmem:[#allocation5] sm:$0xff]
    %v53 = vld [vmem:[#allocation5 + $0x8] sm:$0xff]
    %v54 = vld [vmem:[#allocation5 + $0x10] sm:$0xff]
    %v55 = vld [vmem:[#allocation5 + $0x18] sm:$0xff]
    %v56 = vld [vmem:[#allocation5 + $0x20] sm:$0xff]
    %v57 = vld [vmem:[#allocation5 + $0x28] sm:$0xff]
    %v58 = vld [vmem:[#allocation5 + $0x30] sm:$0xff]
    %v59 = vld [vmem:[#allocation5 + $0x38] sm:$0xff]
    %v60 = vld [vmem:[#allocation5 + $0x40] sm:$0xff]
    %v61 = vld [vmem:[#allocation5 + $0x48] sm:$0xff]
    %v62 = vld [vmem:[#allocation5 + $0x50] sm:$0xff]
    %v63 = vld [vmem:[#allocation5 + $0x58] sm:$0xff]
    %v64 = vld [vmem:[#allocation5 + $0x60] sm:$0xff]
    %v65 = vld [vmem:[#allocation5 + $0x68] sm:$0xff]
    %v66 = vld [vmem:[#allocation5 + $0x70] sm:$0xff]
    %v67 = vld [vmem:[#allocation5 + $0x78] sm:$0xff]
    %v68 = vld [vmem:[#allocation5 + $0x80] sm:$0xff]
    %v69 = vld [vmem:[#allocation5 + $0x88] sm:$0xff]
    %v70 = vld [vmem:[#allocation5 + $0x90] sm:$0xff]
    %v71 = vld [vmem:[#allocation5 + $0x98] sm:$0xff]
    %v72 = vld [vmem:[#allocation5 + $0xa0] sm:$0xff]
    %v73 = vld [vmem:[#allocation5 + $0xa8] sm:$0xff]
    %v74 = vld [vmem:[#allocation5 + $0xb0] sm:$0xff]
    %v75 = vld [vmem:[#allocation5 + $0xb8] sm:$0xff]
    %v76 = vld [vmem:[#allocation5 + $0xc0] sm:$0xff]
    %v77 = vld [vmem:[#allocation5 + $0xc8] sm:$0xff]
    %v78 = vld [vmem:[#allocation5 + $0xd0] sm:$0xff]
    %v79 = vld [vmem:[#allocation5 + $0xd8] sm:$0xff]
    %v80 = vld [vmem:[#allocation5 + $0xe0] sm:$0xff]
    %v81 = vld [vmem:[#allocation5 + $0xe8] sm:$0xff]
    %v82 = vld [vmem:[#allocation5 + $0xf0] sm:$0xff]
    %v83 = vld [vmem:[#allocation5 + $0xf8] sm:$0xff]
    %v84 = vld [vmem:[#allocation5 + $0x100] sm:$0xff]
    %v85 = vld [vmem:[#allocation5 + $0x108] sm:$0xff]
    %v86 = vld [vmem:[#allocation5 + $0x110] sm:$0xff]
    %v87 = vld [vmem:[#allocation5 + $0x118] sm:$0xff]
    %v88 = vld [vmem:[#allocation5 + $0x120] sm:$0xff]
    %v89 = vld [vmem:[#allocation5 + $0x128] sm:$0xff]
    %v90 = vld [vmem:[#allocation5 + $0x130] sm:$0xff]
    %v91 = vld [vmem:[#allocation5 + $0x138] sm:$0xff]
    %v92 = vld [vmem:[#allocation5 + $0x140] sm:$0xff]
    %v93 = vld [vmem:[#allocation5 + $0x148] sm:$0xff]
    %v94 = vld [vmem:[#allocation5 + $0x150] sm:$0xff]
    %v95 = vld [vmem:[#allocation5 + $0x158] sm:$0xff]
    %v96 = vld [vmem:[#allocation5 + $0x160] sm:$0xff]
    %v97 = vld [vmem:[#allocation5 + $0x168] sm:$0xff]
    %v98 = vld [vmem:[#allocation5 + $0x170] sm:$0xff]
    %v99 = vld [vmem:[#allocation5 + $0x178] sm:$0xff]
    %v100 = vld [vmem:[#allocation5 + $0x180] sm:$0xff]
    %v101 = vld [vmem:[#allocation5 + $0x188] sm:$0xff]
    %v102 = vld [vmem:[#allocation5 + $0x190] sm:$0xff]
    %v103 = vld [vmem:[#allocation5 + $0x198] sm:$0xff]
    %v104 = vld [vmem:[#allocation5 + $0x1a0] sm:$0xff]
    %v105 = vld [vmem:[#allocation5 + $0x1a8] sm:$0xff]
    %v106 = vld [vmem:[#allocation5 + $0x1b0] sm:$0xff]
    %v107 = vld [vmem:[#allocation5 + $0x1b8] sm:$0xff]
    %v108 = vld [vmem:[#allocation5 + $0x1c0] sm:$0xff]
    %v109 = vld [vmem:[#allocation5 + $0x1c8] sm:$0xff]
    %v110 = vld [vmem:[#allocation5 + $0x1d0] sm:$0xff]
    %v111 = vld [vmem:[#allocation5 + $0x1d8] sm:$0xff]
    %v112 = vld [vmem:[#allocation5 + $0x1e0] sm:$0xff]
    %v113 = vld [vmem:[#allocation5 + $0x1e8] sm:$0xff]
    %v114 = vld [vmem:[#allocation5 + $0x1f0] sm:$0xff]
    %v115 = vld [vmem:[#allocation5 + $0x1f8] sm:$0xff]
    %v116 = vld [vmem:[#allocation5 + $0x200] sm:$0xff]
    %v117 = vld [vmem:[#allocation5 + $0x208] sm:$0xff]
    %v118 = vld [vmem:[#allocation5 + $0x210] sm:$0xff]
    %v119 = vld [vmem:[#allocation5 + $0x218] sm:$0xff]
    %v120 = vld [vmem:[#allocation5 + $0x220] sm:$0xff]
    %v121 = vld [vmem:[#allocation5 + $0x228] sm:$0xff]
    %v122 = vld [vmem:[#allocation5 + $0x230] sm:$0xff]
    %v123 = vld [vmem:[#allocation5 + $0x238] sm:$0xff]
    %v124 = vld [vmem:[#allocation5 + $0x240] sm:$0xff]
    %v125 = vld [vmem:[#allocation5 + $0x248] sm:$0xff]
    %v126 = vld [vmem:[#allocation5 + $0x250] sm:$0xff]
    %v127 = vld [vmem:[#allocation5 + $0x258] sm:$0xff]
    %v128 = vld [vmem:[#allocation5 + $0x260] sm:$0xff]
    %v129 = vld [vmem:[#allocation5 + $0x268] sm:$0xff]
    %v130 = vld [vmem:[#allocation5 + $0x270] sm:$0xff]
    %v131 = vld [vmem:[#allocation5 + $0x278] sm:$0xff]
    %v132 = vld [vmem:[#allocation5 + $0x280] sm:$0xff]
    %v133 = vld [vmem:[#allocation5 + $0x288] sm:$0xff]
    %v134 = vld [vmem:[#allocation5 + $0x290] sm:$0xff]
    %v135 = vld [vmem:[#allocation5 + $0x298] sm:$0xff]
    %v136 = vld [vmem:[#allocation5 + $0x2a0] sm:$0xff]
    %v137 = vld [vmem:[#allocation5 + $0x2a8] sm:$0xff]
    %v138 = vld [vmem:[#allocation5 + $0x2b0] sm:$0xff]
    %v139 = vld [vmem:[#allocation5 + $0x2b8] sm:$0xff]
    %v140 = vld [vmem:[#allocation5 + $0x2c0] sm:$0xff]
    %v141 = vld [vmem:[#allocation5 + $0x2c8] sm:$0xff]
    %v142 = vld [vmem:[#allocation5 + $0x2d0] sm:$0xff]
    %v143 = vld [vmem:[#allocation5 + $0x2d8] sm:$0xff]
    %v144 = vld [vmem:[#allocation5 + $0x2e0] sm:$0xff]
    %v145 = vld [vmem:[#allocation5 + $0x2e8] sm:$0xff]
    %v146 = vld [vmem:[#allocation5 + $0x2f0] sm:$0xff]
    %v147 = vld [vmem:[#allocation5 + $0x2f8] sm:$0xff]
    %v148 = vld [vmem:[#allocation5 + $0x300] sm:$0xff]
    %v149 = vld [vmem:[#allocation5 + $0x308] sm:$0xff]
    %v150 = vld [vmem:[#allocation5 + $0x310] sm:$0xff]
    %v151 = vld [vmem:[#allocation5 + $0x318] sm:$0xff]
    %v152 = vld [vmem:[#allocation5 + $0x320] sm:$0xff]
    %v153 = vld [vmem:[#allocation5 + $0x328] sm:$0xff]
    %v154 = vld [vmem:[#allocation5 + $0x330] sm:$0xff]
    %v155 = vld [vmem:[#allocation5 + $0x338] sm:$0xff]
    %v156 = vld [vmem:[#allocation5 + $0x340] sm:$0xff]
    %v157 = vld [vmem:[#allocation5 + $0x348] sm:$0xff]
    %v158 = vld [vmem:[#allocation5 + $0x350] sm:$0xff]
    %v159 = vld [vmem:[#allocation5 + $0x358] sm:$0xff]
    %v160 = vld [vmem:[#allocation5 + $0x360] sm:$0xff]
    %v161 = vld [vmem:[#allocation5 + $0x368] sm:$0xff]
    %v162 = vld [vmem:[#allocation5 + $0x370] sm:$0xff]
    %v163 = vld [vmem:[#allocation5 + $0x378] sm:$0xff]
    %v164 = vld [vmem:[#allocation5 + $0x380] sm:$0xff]
    %v165 = vld [vmem:[#allocation5 + $0x388] sm:$0xff]
    %v166 = vld [vmem:[#allocation5 + $0x390] sm:$0xff]
    %v167 = vld [vmem:[#allocation5 + $0x398] sm:$0xff]
    %v168 = vld [vmem:[#allocation5 + $0x3a0] sm:$0xff]
    %v169 = vld [vmem:[#allocation5 + $0x3a8] sm:$0xff]
    %v170 = vld [vmem:[#allocation5 + $0x3b0] sm:$0xff]
    %v171 = vld [vmem:[#allocation5 + $0x3b8] sm:$0xff]
    %v172 = vld [vmem:[#allocation5 + $0x3c0] sm:$0xff]
    %v173 = vld [vmem:[#allocation5 + $0x3c8] sm:$0xff]
    %v174 = vld [vmem:[#allocation5 + $0x3d0] sm:$0xff]
    %v175 = vld [vmem:[#allocation5 + $0x3d8] sm:$0xff]
    %v176 = vld [vmem:[#allocation5 + $0x3e0] sm:$0xff]
    %v177 = vld [vmem:[#allocation5 + $0x3e8] sm:$0xff]
    %v178 = vld [vmem:[#allocation5 + $0x3f0] sm:$0xff]
    %v179 = vld [vmem:[#allocation5 + $0x3f8] sm:$0xff]
    %v180 = vld [vmem:[%s2] sm:$0x1]
    %v182 = vlaneseq
    %v183 = vshrl.u32 %v182, 7
    %v184 = vsub.s32 0, %v183
    %v185 = vrot.slane %v180, %v184
    %187 = vmatprep.subr.mxu0 0.0
    %188 = vmatpush1.msra.mxu0 %v52
    %189 = vmatprep.subr.mxu0 0.0
    %190 = vmatpush1.msra.mxu0 %v53
    %191 = vmatprep.subr.mxu0 0.0
    %192 = vmatpush1.msra.mxu0 %v54
    %193 = vmatprep.subr.mxu0 0.0
    %194 = vmatpush1.msra.mxu0 %v55
    %195 = vmatprep.subr.mxu0 0.0
    %196 = vmatpush1.msra.mxu0 %v56
    %197 = vmatprep.subr.mxu0 0.0
    %198 = vmatpush1.msra.mxu0 %v57
    %199 = vmatprep.subr.mxu0 0.0
    %200 = vmatpush1.msra.mxu0 %v58
    %201 = vmatprep.subr.mxu0 0.0
    %202 = vmatpush1.msra.mxu0 %v59
    %203 = vmatprep.subr.mxu0 0.0
    %204 = vmatpush1.msra.mxu0 %v60
    %205 = vmatprep.subr.mxu0 0.0
    %206 = vmatpush1.msra.mxu0 %v61
    %207 = vmatprep.subr.mxu0 0.0
    %208 = vmatpush1.msra.mxu0 %v62
    %209 = vmatprep.subr.mxu0 0.0
    %210 = vmatpush1.msra.mxu0 %v63
    %211 = vmatprep.subr.mxu0 0.0
    %212 = vmatpush1.msra.mxu0 %v64
    %213 = vmatprep.subr.mxu0 0.0
    %214 = vmatpush1.msra.mxu0 %v65
    %215 = vmatprep.subr.mxu0 0.0
    %216 = vmatpush1.msra.mxu0 %v66
    %217 = vmatprep.subr.mxu0 0.0
    %218 = vmatpush1.msra.mxu0 %v67
    %219 = vmatprep.subr.mxu0 0.0
    %220 = vmatpush1.msra.mxu0 %v68
    %221 = vmatprep.subr.mxu0 0.0
    %222 = vmatpush1.msra.mxu0 %v69
    %223 = vmatprep.subr.mxu0 0.0
    %224 = vmatpush1.msra.mxu0 %v70
    %225 = vmatprep.subr.mxu0 0.0
    %226 = vmatpush1.msra.mxu0 %v71
    %227 = vmatprep.subr.mxu0 0.0
    %228 = vmatpush1.msra.mxu0 %v72
    %229 = vmatprep.subr.mxu0 0.0
    %230 = vmatpush1.msra.mxu0 %v73
    %231 = vmatprep.subr.mxu0 0.0
    %232 = vmatpush1.msra.mxu0 %v74
    %233 = vmatprep.subr.mxu0 0.0
    %234 = vmatpush1.msra.mxu0 %v75
    %235 = vmatprep.subr.mxu0 0.0
    %236 = vmatpush1.msra.mxu0 %v76
    %237 = vmatprep.subr.mxu0 0.0
    %238 = vmatpush1.msra.mxu0 %v77
    %239 = vmatprep.subr.mxu0 0.0
    %240 = vmatpush1.msra.mxu0 %v78
    %241 = vmatprep.subr.mxu0 0.0
    %242 = vmatpush1.msra.mxu0 %v79
    %243 = vmatprep.subr.mxu0 0.0
    %244 = vmatpush1.msra.mxu0 %v80
    %245 = vmatprep.subr.mxu0 0.0
    %246 = vmatpush1.msra.mxu0 %v81
    %247 = vmatprep.subr.mxu0 0.0
    %248 = vmatpush1.msra.mxu0 %v82
    %249 = vmatprep.subr.mxu0 0.0
    %250 = vmatpush1.msra.mxu0 %v83
    %251 = vmatprep.mubr.f32.mxu0 %v45
    %252 = vmatmul.mubr.f32.gmra.mrb[0].mxu0 %v44
    %v253 = vpop.f32.mrb[0].mxu0
    %v254 = vadd.f32 %v185, %v253
    %v255 = vpop.f32.mrb[0].mxu0
    %256 = vdwg.mxu0
    %257 = vmatprep.subr.mxu0 0.0
    %258 = vmatpush1.msra.mxu0 %v84
    %259 = vmatprep.subr.mxu0 0.0
    %260 = vmatpush1.msra.mxu0 %v85
    %261 = vmatprep.subr.mxu0 0.0
    %262 = vmatpush1.msra.mxu0 %v86
    %263 = vmatprep.subr.mxu0 0.0
    %264 = vmatpush1.msra.mxu0 %v87
    %265 = vmatprep.subr.mxu0 0.0
    %266 = vmatpush1.msra.mxu0 %v88
    %267 = vmatprep.subr.mxu0 0.0
    %268 = vmatpush1.msra.mxu0 %v89
    %269 = vmatprep.subr.mxu0 0.0
    %270 = vmatpush1.msra.mxu0 %v90
    %271 = vmatprep.subr.mxu0 0.0
    %272 = vmatpush1.msra.mxu0 %v91
    %273 = vmatprep.subr.mxu0 0.0
    %274 = vmatpush1.msra.mxu0 %v92
    %275 = vmatprep.subr.mxu0 0.0
    %276 = vmatpush1.msra.mxu0 %v93
    %277 = vmatprep.subr.mxu0 0.0
    %278 = vmatpush1.msra.mxu0 %v94
    %279 = vmatprep.subr.mxu0 0.0
    %280 = vmatpush1.msra.mxu0 %v95
    %281 = vmatprep.subr.mxu0 0.0
    %282 = vmatpush1.msra.mxu0 %v96
    %283 = vmatprep.subr.mxu0 0.0
    %284 = vmatpush1.msra.mxu0 %v97
    %285 = vmatprep.subr.mxu0 0.0
    %286 = vmatpush1.msra.mxu0 %v98
    %287 = vmatprep.subr.mxu0 0.0
    %288 = vmatpush1.msra.mxu0 %v99
    %289 = vmatprep.subr.mxu0 0.0
    %290 = vmatpush1.msra.mxu0 %v100
    %291 = vmatprep.subr.mxu0 0.0
    %292 = vmatpush1.msra.mxu0 %v101
    %293 = vmatprep.subr.mxu0 0.0
    %294 = vmatpush1.msra.mxu0 %v102
    %295 = vmatprep.subr.mxu0 0.0
    %296 = vmatpush1.msra.mxu0 %v103
    %297 = vmatprep.subr.mxu0 0.0
    %298 = vmatpush1.msra.mxu0 %v104
    %299 = vmatprep.subr.mxu0 0.0
    %300 = vmatpush1.msra.mxu0 %v105
    %301 = vmatprep.subr.mxu0 0.0
    %302 = vmatpush1.msra.mxu0 %v106
    %303 = vmatprep.subr.mxu0 0.0
    %304 = vmatpush1.msra.mxu0 %v107
    %305 = vmatprep.subr.mxu0 0.0
    %306 = vmatpush1.msra.mxu0 %v108
    %307 = vmatprep.subr.mxu0 0.0
    %308 = vmatpush1.msra.mxu0 %v109
    %309 = vmatprep.subr.mxu0 0.0
    %310 = vmatpush1.msra.mxu0 %v110
    %311 = vmatprep.subr.mxu0 0.0
    %312 = vmatpush1.msra.mxu0 %v111
    %313 = vmatprep.subr.mxu0 0.0
    %314 = vmatpush1.msra.mxu0 %v112
    %315 = vmatprep.subr.mxu0 0.0
    %316 = vmatpush1.msra.mxu0 %v113
    %317 = vmatprep.subr.mxu0 0.0
    %318 = vmatpush1.msra.mxu0 %v114
    %319 = vmatprep.subr.mxu0 0.0
    %320 = vmatpush1.msra.mxu0 %v115
    %321 = vmatprep.mubr.f32.mxu0 %v47
    %322 = vmatmul.mubr.f32.gmra.mrb[0].mxu0 %v46
    %v323 = vpop.f32.mrb[0].mxu0
    %v324 = vadd.f32 %v254, %v323
    %v325 = vpop.f32.mrb[0].mxu0
    %326 = vdwg.mxu0
    %327 = vmatprep.subr.mxu0 0.0
    %328 = vmatpush1.msra.mxu0 %v116
    %329 = vmatprep.subr.mxu0 0.0
    %330 = vmatpush1.msra.mxu0 %v117
    %331 = vmatprep.subr.mxu0 0.0
    %332 = vmatpush1.msra.mxu0 %v118
    %333 = vmatprep.subr.mxu0 0.0
    %334 = vmatpush1.msra.mxu0 %v119
    %335 = vmatprep.subr.mxu0 0.0
    %336 = vmatpush1.msra.mxu0 %v120
    %337 = vmatprep.subr.mxu0 0.0
    %338 = vmatpush1.msra.mxu0 %v121
    %339 = vmatprep.subr.mxu0 0.0
    %340 = vmatpush1.msra.mxu0 %v122
    %341 = vmatprep.subr.mxu0 0.0
    %342 = vmatpush1.msra.mxu0 %v123
    %343 = vmatprep.subr.mxu0 0.0
    %344 = vmatpush1.msra.mxu0 %v124
    %345 = vmatprep.subr.mxu0 0.0
    %346 = vmatpush1.msra.mxu0 %v125
    %347 = vmatprep.subr.mxu0 0.0
    %348 = vmatpush1.msra.mxu0 %v126
    %349 = vmatprep.subr.mxu0 0.0
    %350 = vmatpush1.msra.mxu0 %v127
    %351 = vmatprep.subr.mxu0 0.0
    %352 = vmatpush1.msra.mxu0 %v128
    %353 = vmatprep.subr.mxu0 0.0
    %354 = vmatpush1.msra.mxu0 %v129
    %355 = vmatprep.subr.mxu0 0.0
    %356 = vmatpush1.msra.mxu0 %v130
    %357 = vmatprep.subr.mxu0 0.0
    %358 = vmatpush1.msra.mxu0 %v131
    %359 = vmatprep.subr.mxu0 0.0
    %360 = vmatpush1.msra.mxu0 %v132
    %361 = vmatprep.subr.mxu0 0.0
    %362 = vmatpush1.msra.mxu0 %v133
    %363 = vmatprep.subr.mxu0 0.0
    %364 = vmatpush1.msra.mxu0 %v134
    %365 = vmatprep.subr.mxu0 0.0
    %366 = vmatpush1.msra.mxu0 %v135
    %367 = vmatprep.subr.mxu0 0.0
    %368 = vmatpush1.msra.mxu0 %v136
    %369 = vmatprep.subr.mxu0 0.0
    %370 = vmatpush1.msra.mxu0 %v137
    %371 = vmatprep.subr.mxu0 0.0
    %372 = vmatpush1.msra.mxu0 %v138
    %373 = vmatprep.subr.mxu0 0.0
    %374 = vmatpush1.msra.mxu0 %v139
    %375 = vmatprep.subr.mxu0 0.0
    %376 = vmatpush1.msra.mxu0 %v140
    %377 = vmatprep.subr.mxu0 0.0
    %378 = vmatpush1.msra.mxu0 %v141
    %379 = vmatprep.subr.mxu0 0.0
    %380 = vmatpush1.msra.mxu0 %v142
    %381 = vmatprep.subr.mxu0 0.0
    %382 = vmatpush1.msra.mxu0 %v143
    %383 = vmatprep.subr.mxu0 0.0
    %384 = vmatpush1.msra.mxu0 %v144
    %385 = vmatprep.subr.mxu0 0.0
    %386 = vmatpush1.msra.mxu0 %v145
    %387 = vmatprep.subr.mxu0 0.0
    %388 = vmatpush1.msra.mxu0 %v146
    %389 = vmatprep.subr.mxu0 0.0
    %390 = vmatpush1.msra.mxu0 %v147
    %391 = vmatprep.mubr.f32.mxu0 %v49
    %392 = vmatmul.mubr.f32.gmra.mrb[0].mxu0 %v48
    %v393 = vpop.f32.mrb[0].mxu0
    %v394 = vadd.f32 %v324, %v393
    %v395 = vpop.f32.mrb[0].mxu0
    %396 = vdwg.mxu0
    %397 = vmatprep.subr.mxu0 0.0
    %398 = vmatpush1.msra.mxu0 %v148
    %399 = vmatprep.subr.mxu0 0.0
    %400 = vmatpush1.msra.mxu0 %v149
    %401 = vmatprep.subr.mxu0 0.0
    %402 = vmatpush1.msra.mxu0 %v150
    %403 = vmatprep.subr.mxu0 0.0
    %404 = vmatpush1.msra.mxu0 %v151
    %405 = vmatprep.subr.mxu0 0.0
    %406 = vmatpush1.msra.mxu0 %v152
    %407 = vmatprep.subr.mxu0 0.0
    %408 = vmatpush1.msra.mxu0 %v153
    %409 = vmatprep.subr.mxu0 0.0
    %410 = vmatpush1.msra.mxu0 %v154
    %411 = vmatprep.subr.mxu0 0.0
    %412 = vmatpush1.msra.mxu0 %v155
    %413 = vmatprep.subr.mxu0 0.0
    %414 = vmatpush1.msra.mxu0 %v156
    %415 = vmatprep.subr.mxu0 0.0
    %416 = vmatpush1.msra.mxu0 %v157
    %417 = vmatprep.subr.mxu0 0.0
    %418 = vmatpush1.msra.mxu0 %v158
    %419 = vmatprep.subr.mxu0 0.0
    %420 = vmatpush1.msra.mxu0 %v159
    %421 = vmatprep.subr.mxu0 0.0
    %422 = vmatpush1.msra.mxu0 %v160
    %423 = vmatprep.subr.mxu0 0.0
    %424 = vmatpush1.msra.mxu0 %v161
    %425 = vmatprep.subr.mxu0 0.0
    %426 = vmatpush1.msra.mxu0 %v162
    %427 = vmatprep.subr.mxu0 0.0
    %428 = vmatpush1.msra.mxu0 %v163
    %429 = vmatprep.subr.mxu0 0.0
    %430 = vmatpush1.msra.mxu0 %v164
    %431 = vmatprep.subr.mxu0 0.0
    %432 = vmatpush1.msra.mxu0 %v165
    %433 = vmatprep.subr.mxu0 0.0
    %434 = vmatpush1.msra.mxu0 %v166
    %435 = vmatprep.subr.mxu0 0.0
    %436 = vmatpush1.msra.mxu0 %v167
    %437 = vmatprep.subr.mxu0 0.0
    %438 = vmatpush1.msra.mxu0 %v168
    %439 = vmatprep.subr.mxu0 0.0
    %440 = vmatpush1.msra.mxu0 %v169
    %441 = vmatprep.subr.mxu0 0.0
    %442 = vmatpush1.msra.mxu0 %v170
    %443 = vmatprep.subr.mxu0 0.0
    %444 = vmatpush1.msra.mxu0 %v171
    %445 = vmatprep.subr.mxu0 0.0
    %446 = vmatpush1.msra.mxu0 %v172
    %447 = vmatprep.subr.mxu0 0.0
    %448 = vmatpush1.msra.mxu0 %v173
    %449 = vmatprep.subr.mxu0 0.0
    %450 = vmatpush1.msra.mxu0 %v174
    %451 = vmatprep.subr.mxu0 0.0
    %452 = vmatpush1.msra.mxu0 %v175
    %453 = vmatprep.subr.mxu0 0.0
    %454 = vmatpush1.msra.mxu0 %v176
    %455 = vmatprep.subr.mxu0 0.0
    %456 = vmatpush1.msra.mxu0 %v177
    %457 = vmatprep.subr.mxu0 0.0
    %458 = vmatpush1.msra.mxu0 %v178
    %459 = vmatprep.subr.mxu0 0.0
    %460 = vmatpush1.msra.mxu0 %v179
    %461 = vmatprep.mubr.f32.mxu0 %v51
    %462 = vmatmul.mubr.f32.gmra.mrb[0].mxu0 %v50
    %v463 = vpop.f32.mrb[0].mxu0
    %v464 = vadd.f32 %v394, %v463
    %v465 = vpop.f32.mrb[0].mxu0
    %466 = vdwg.mxu0
    %467 = vst [vmem:[#allocation7] sm:$0xff] %v464
    %468 = vmax.xlane.f32.xlu0 %v464
    %v469 = vpop.xlane.xlu0 %468
    %v470 = vsub.f32 %v464, %v469
    %v471 = vmul.f32 %v470, 1.442695
    %v472 = vpow.pop %v471
    %473 = vadd.xlane.f32.xlu0 %v472
    %v474 = vpop.xlane.xlu0 %473
    %v475 = vlog2.pop %v474
    %v476 = vmul.f32 %v475, 0.6931472
    %v477 = vsub.f32 %v470, %v476
    %478 = vst [vmem:[#allocation8] sm:$0xff] %v477
    // Predicated region
    $region22: #{tpu_custom_call.1} parent=1 // pred_check
      _
    $region23: #{tpu_custom_call.1} parent=1 // pred_check_branch
      %480 = sbr.rel (0) target = $region25
    $region24: #{tpu_custom_call.1} parent=1 // pred_region
      %s482 = ssub.s32 128, 128
      %483 = vsyncadd [#allocation4], %s482
      %s485 = sshll.u32 [#allocation7], 4
      %s486 = int_to_ptr.vmem [resolvable:$true] %s485
      %488 = dma.vmem_to_hbm [thread:$0]  %s486, 128, %s3, [#allocation4]
    $region25: #{tpu_custom_call.1} parent=1 // pred_fallthru
      _
    // Predicated region
    $region26: #{tpu_custom_call.1} parent=1 // pred_check
      _
    $region27: #{tpu_custom_call.1} parent=1 // pred_check_branch
      %490 = sbr.rel (0) target = $region29
    $region28: #{tpu_custom_call.1} parent=1 // pred_region
      %s492 = ssub.s32 128, 128
      %493 = vsyncadd [#allocation9], %s492
      %s495 = sshll.u32 [#allocation8], 4
      %s496 = int_to_ptr.vmem [resolvable:$true] %s495
      %498 = dma.vmem_to_hbm [thread:$0]  %s496, 128, %s4, [#allocation9]
    $region29: #{tpu_custom_call.1} parent=1 // pred_fallthru
      _
    // Predicated region
    $region30: #{tpu_custom_call.1} parent=1 // pred_check
      _
    $region31: #{tpu_custom_call.1} parent=1 // pred_check_branch
      %500 = sbr.rel (0) target = $region33
    $region32: #{tpu_custom_call.1} parent=1 // pred_region
      %501 = dma.done [#allocation4], 128
    $region33: #{tpu_custom_call.1} parent=1 // pred_fallthru
      _
    // Predicated region
    $region34: #{tpu_custom_call.1} parent=1 // pred_check
      _
    $region35: #{tpu_custom_call.1} parent=1 // pred_check_branch
      %503 = sbr.rel (0) target = $region37
    $region36: #{tpu_custom_call.1} parent=1 // pred_region
      %504 = dma.done [#allocation9], 128
    $region37: #{tpu_custom_call.1} parent=1 // pred_fallthru
      _
    %505 = vsyncpa [#allocation3], 1
    %506 = vsyncpa [#allocation6], 1
    %507 = vsyncpa [#allocation4], 1
    %508 = vsyncpa [#allocation9], 1

</llo_original>
